<compile_context>
chip_gen: v6e
topology: v6e:2x2x1
jax: 0.10.0
libtpu: 0.0.40
codegen_flags: <defaults>
</compile_context>

<pallas_src>
import jax
import jax.numpy as jnp
from jax import lax
from jax.experimental import pallas as pl
from jax.experimental.pallas import tpu as pltpu


# --------------------------------------------------------------------------
# Helpers
# --------------------------------------------------------------------------
def _round_up(x, m):
    return ((x + m - 1) // m) * m


def _largest_divisor_tile(total, target, quantum):
    """Largest multiple of `quantum` that divides `total` and is <= target."""
    best = quantum
    t = quantum
    limit = min(target, total)
    while t <= limit:
        if total % t == 0:
            best = t
        t += quantum
    return best


def _resolve_compute_dtype(requested):
    """'auto' -> bf16 operands on v5e (bf16-native MXU/VPU), else keep f32."""
    if isinstance(requested, str) and requested == "auto":
        try:
            kind = jax.devices()[0].device_kind.lower()
        except Exception:
            return None
        if "v5" in kind and ("lite" in kind or "v5e" in kind):
            return jnp.bfloat16
        return None
    return requested


def _vmem_budget_bytes():
    """(tile budget for planner, vmem_limit_bytes for CompilerParams)."""
    try:
        info = pltpu.get_tpu_info()
        cap = getattr(info, "vmem_capacity_bytes", None) or (64 << 20)
    except Exception:
        cap = 64 << 20  # conservative: v7x per-TC physical VMEM
    budget = int(cap * 0.70)                     # double-buffered tile budget
    vmem_limit = min(int(cap * 0.85), 128 << 20)  # scoped limit, with headroom
    return budget, vmem_limit


def _choose_plan(B, N, K, x_bytes, w_bytes, out_bytes, pack, budget):
    """Pick tiles within the VMEM budget.

    Preferred: full-K plan (tk == Kp) — no accumulator scratch, no reduction
    grid axis, and the (tn, Kp) weight strip stays VMEM-resident across the
    inner batch-tile axis, so the weight is read from HBM exactly once.
    Fallback: K-tiled plan with an f32 accumulator for very large K.
    """
    Kp = _round_up(K, 128)
    Np = _round_up(N, 128)
    Bp = _round_up(B, pack)

    def fullk_bytes(tm, tn):
        # double-buffered x, weight-strip, out blocks + bias row
        return 2 * (tm * Kp * x_bytes + tn * Kp * w_bytes
                    + tm * tn * out_bytes + tn * 4)

    for tn_t, tm_t in ((512, 512), (512, 256), (256, 256), (256, 128),
                       (128, 128), (128, 64), (128, 32)):
        if tm_t % pack:
            continue
        tn = _largest_divisor_tile(Np, tn_t, 128)
        tm = min(tm_t, Bp)
        if fullk_bytes(tm, tn) <= budget:
            return {"mode": "fullk", "tm": tm, "tn": tn, "tk": Kp,
                    "Np": Np, "Kp": Kp}

    # K-tiled fallback (huge K): reduction axis innermost + f32 accumulator.
    tm = min(256, Bp)
    tn = _largest_divisor_tile(Np, 256, 128)

    def ktiled_bytes(tk):
        return (2 * (tm * tk * x_bytes + tn * tk * w_bytes
                     + tm * tn * out_bytes + tn * 4)
                + tm * tn * 4)  # accumulator scratch (single-buffered)

    tk = _largest_divisor_tile(Kp, 2048, 128)
    while tk > 128 and ktiled_bytes(tk) > budget:
        tk = _largest_divisor_tile(Kp, tk - 128, 128)
    return {"mode": "ktiled", "tm": tm, "tn": tn, "tk": tk,
            "Np": Np, "Kp": Kp}


# --------------------------------------------------------------------------
# Kernels
# --------------------------------------------------------------------------
def _linear_fullk_kernel(x_ref, w_ref, b_ref, o_ref):
    # x_ref: (tm, Kp)   w_ref: (tn, Kp)  [torch (N, K) layout, contract dim 1]
    # b_ref: (1, tn)    o_ref: (tm, tn)
    # Single MXU dot with f32 accumulation, bias fused, direct store — no
    # VMEM scratch accumulator and no reduction grid axis.
    acc = lax.dot_general(
        x_ref[...], w_ref[...],
        dimension_numbers=(((1,), (1,)), ((), ())),
        preferred_element_type=jnp.float32,
    )
    o_ref[...] = (acc + b_ref[...].astype(jnp.float32)).astype(o_ref.dtype)


def _linear_ktiled_kernel(x_ref, w_ref, b_ref, o_ref, acc_ref):
    # Fallback for very large K: grid (j, i, k) with k innermost.
    k = pl.program_id(2)

    @pl.when(k == 0)
    def _():
        acc_ref[...] = jnp.zeros_like(acc_ref)

    acc_ref[...] += lax.dot_general(
        x_ref[...], w_ref[...],
        dimension_numbers=(((1,), (1,)), ((), ())),
        preferred_element_type=jnp.float32,
    )

    @pl.when(k == pl.num_programs(2) - 1)
    def _():
        o_ref[...] = (acc_ref[...] + b_ref[...].astype(jnp.float32)
                      ).astype(o_ref.dtype)


# --------------------------------------------------------------------------
# Wrappers
# --------------------------------------------------------------------------
def prepare_linear_params(weight, bias, *, compute_dtype="auto"):
    """One-time parameter prep (outside the per-call hot path).

    Pads weight (torch (N, K) layout — NOT transposed) and bias to
    128-aligned N / K and optionally casts the weight to the MXU compute
    dtype.  Zero-padding along K is contraction-safe.
    """
    N, K = weight.shape
    cdt = _resolve_compute_dtype(compute_dtype)
    if cdt is not None:
        weight = weight.astype(cdt)
    Kp = _round_up(K, 128)
    Np = _round_up(N, 128)
    w_p = jnp.pad(weight, ((0, Np - N), (0, Kp - K)))
    b_p = jnp.pad(bias.astype(jnp.float32), (0, Np - N)).reshape(1, Np)
    return w_p, b_p


def linear_forward(x, w_p, b_p, n_out, *, compute_dtype="auto"):
    """y = x @ weight.T + bias with pre-prepared (padded/cast) parameters.

    x:   (B, input_dim)
    w_p: (Np, Kp)  padded torch-layout weight from prepare_linear_params
    b_p: (1, Np)   padded f32 bias row
    """
    B, K = x.shape
    Np, Kp = w_p.shape
    assert Kp == _round_up(K, 128), "prepared weight does not match x's K"
    assert b_p.shape == (1, Np)

    out_dtype = x.dtype
    cdt = _resolve_compute_dtype(compute_dtype)
    if cdt is not None:
        x = x.astype(cdt)

    x_bytes = x.dtype.itemsize
    w_bytes = w_p.dtype.itemsize
    out_bytes = jnp.dtype(out_dtype).itemsize
    pack = max(8, 32 // x_bytes)  # sublane packing: 8 f32 / 16 bf16 / 32 int8

    budget, vmem_limit = _vmem_budget_bytes()
    plan = _choose_plan(B, Np, K, x_bytes, w_bytes, out_bytes, pack, budget)
    tm, tn, tk = plan["tm"], plan["tn"], plan["tk"]

    Mp = _round_up(B, tm)
    if (Mp, Kp) != (B, K):
        # Only x is padded per call (cheap); params were padded once.
        x = jnp.pad(x, ((0, Mp - B), (0, Kp - K)))

    cost = pl.CostEstimate(
        flops=2 * Mp * Np * Kp,
        transcendentals=0,
        bytes_accessed=(Mp * Kp * x_bytes + Np * Kp * w_bytes
                        + Np * 4 + Mp * Np * out_bytes),
    )

    if plan["mode"] == "fullk":
        # Grid: j (output-column tile) OUTER, i (batch tile) INNER.
        # Weight index_map ignores i -> the (tn, Kp) strip is DMA'd once per
        # j and stays VMEM-resident across all consecutive batch tiles.
        grid = (Np // tn, Mp // tm)
        grid_spec = pltpu.PrefetchScalarGridSpec(
            num_scalar_prefetch=0,
            grid=grid,
            in_specs=[
                pl.BlockSpec((tm, Kp), lambda j, i: (i, 0)),   # x
                pl.BlockSpec((tn, Kp), lambda j, i: (j, 0)),   # weight strip
                pl.BlockSpec((1, tn), lambda j, i: (0, j)),    # bias row
            ],
            out_specs=pl.BlockSpec((tm, tn), lambda j, i: (i, j)),
        )
        kernel = _linear_fullk_kernel
        dim_sem = ("parallel", "parallel")
    else:
        grid = (Np // tn, Mp // tm, Kp // tk)
        grid_spec = pltpu.PrefetchScalarGridSpec(
            num_scalar_prefetch=0,
            grid=grid,
            in_specs=[
                pl.BlockSpec((tm, tk), lambda j, i, k: (i, k)),
                pl.BlockSpec((tn, tk), lambda j, i, k: (j, k)),
                pl.BlockSpec((1, tn), lambda j, i, k: (0, j)),
            ],
            out_specs=pl.BlockSpec((tm, tn), lambda j, i, k: (i, j)),
            scratch_shapes=[pltpu.VMEM((tm, tn), jnp.float32)],
        )
        kernel = _linear_ktiled_kernel
        dim_sem = ("parallel", "parallel", "arbitrary")

    out = pl.pallas_call(
        kernel,
        out_shape=jax.ShapeDtypeStruct((Mp, Np), out_dtype),
        grid_spec=grid_spec,
        compiler_params=pltpu.CompilerParams(
            dimension_semantics=dim_sem,
            vmem_limit_bytes=vmem_limit,
        ),
        cost_estimate=cost,
    )(x, w_p, b_p)

    return out[:B, :n_out]


def linear_regression_forward(x, weight, bias, *, compute_dtype="auto"):
    """Convenience one-shot wrapper matching the PyTorch module forward
    (QuantStub/DeQuantStub are identity in float mode).  For production,
    hoist prepare_linear_params() out of the per-call hot path."""
    w_p, b_p = prepare_linear_params(weight, bias, compute_dtype=compute_dtype)
    return linear_forward(x, w_p, b_p, weight.shape[0],
                          compute_dtype=compute_dtype)


# --------------------------------------------------------------------------
# Demo / correctness check
# --------------------------------------------------------------------------
if __name__ == "__main__":
    # Small shapes consistent with LinearRegression(input_dim=32, output_dim=16)
    B, input_dim, output_dim = 8, 32, 16

    key = jax.random.PRNGKey(0)
    kx, kw, kb = jax.random.split(key, 3)

    x = jax.random.normal(kx, (B, input_dim), dtype=jnp.float32)
    # Mimic nn.Linear's uniform(-1/sqrt(fan_in), 1/sqrt(fan_in)) init.
    bound = 1.0 / jnp.sqrt(jnp.float32(input_dim))
    weight = jax.random.uniform(kw, (output_dim, input_dim), jnp.float32,
                                minval=-bound, maxval=bound)
    bias = jax.random.uniform(kb, (output_dim,), jnp.float32,
                              minval=-bound, maxval=bound)

    y_ref = x @ weight.T + bias

    # f32-operand path (tight tolerance).  Params prepared once, outside the
    # jitted per-call hot path.
    w_p, b_p = prepare_linear_params(weight, bias, compute_dtype=jnp.float32)
    fwd_f32 = jax.jit(lambda xx: linear_forward(xx, w_p, b_p, output_dim,
                                                compute_dtype=jnp.float32))
    y = jax.block_until_ready(fwd_f32(x))
    assert y.shape == (B, output_dim)
    assert jnp.allclose(y, y_ref, atol=1e-5, rtol=1e-5)

    # bf16-operand / f32-accumulate path (MXU-native; the v5e default).
    w_bf, b_bf = prepare_linear_params(weight, bias, compute_dtype=jnp.bfloat16)
    fwd_bf16 = jax.jit(lambda xx: linear_forward(xx, w_bf, b_bf, output_dim,
                                                 compute_dtype=jnp.bfloat16))
    y_bf16 = jax.block_until_ready(fwd_bf16(x))
    assert y_bf16.shape == (B, output_dim)
    assert jnp.allclose(y_bf16, y_ref, atol=3e-2, rtol=3e-2)

    # Chip-aware "auto" convenience path (bf16 on v5e, f32 elsewhere).
    y_auto = jax.block_until_ready(linear_regression_forward(x, weight, bias))
    assert y_auto.shape == (B, output_dim)
    assert jnp.allclose(y_auto, y_ref, atol=3e-2, rtol=3e-2)

    print("KERNEL_OK")
</pallas_src>

<mosaic_0001>
module attributes {stable_mosaic.version = 11 : i64} {
  func.func @_linear_fullk_kernel(%arg0: i32, %arg1: i32, %arg2: memref<8x128xf32, #tpu.memory_space<vmem>>, %arg3: memref<128x128xf32, #tpu.memory_space<vmem>>, %arg4: memref<1x128xf32, #tpu.memory_space<vmem>>, %arg5: memref<8x128xf32, #tpu.memory_space<vmem>>) attributes {dimension_semantics = [#tpu.dimension_semantics<parallel>, #tpu.dimension_semantics<parallel>], iteration_bounds = array<i64: 1, 1>, scalar_prefetch = 0 : i64, scratch_operands = 0 : i64, tpu.core_type = #tpu.core_type<tc>, window_params = [{transform_indices = @transform_0, window_bounds = array<i64: 8, 128>}, {transform_indices = @transform_1, window_bounds = array<i64: 128, 128>}, {transform_indices = @transform_2, window_bounds = array<i64: 1, 128>}, {transform_indices = @transform_3, window_bounds = array<i64: 8, 128>}]} {
    %c0 = arith.constant 0 : index
    %c0_0 = arith.constant 0 : index
    %0 = vector.load %arg2[%c0, %c0_0] : memref<8x128xf32, #tpu.memory_space<vmem>>, vector<8x128xf32>
    %c0_1 = arith.constant 0 : index
    %c0_2 = arith.constant 0 : index
    %1 = vector.load %arg3[%c0_1, %c0_2] : memref<128x128xf32, #tpu.memory_space<vmem>>, vector<128x128xf32>
    %cst = arith.constant dense<0.000000e+00> : vector<8x128xf32>
    %2 = tpu.matmul %0, %1, %cst {dimension_numbers = #tpu.dot_dimension_numbers<[1], [1], [0], [0], [0, 0, 1, 0], [], []>} : vector<8x128xf32>, vector<128x128xf32>, vector<8x128xf32> -> vector<8x128xf32>
    %c0_3 = arith.constant 0 : index
    %c0_4 = arith.constant 0 : index
    %3 = vector.load %arg4[%c0_3, %c0_4] : memref<1x128xf32, #tpu.memory_space<vmem>>, vector<1x128xf32>
    %4 = vector.broadcast %3 : vector<1x128xf32> to vector<8x128xf32>
    %5 = arith.addf %2, %4 : vector<8x128xf32>
    %c0_5 = arith.constant 0 : index
    %c0_6 = arith.constant 0 : index
    %6 = vector.load %arg5[%c0_5, %c0_6] : memref<8x128xf32, #tpu.memory_space<vmem>>, vector<8x128xf32>
    tpu.vector_store %arg5[%c0_5, %c0_6], %5 {strides = array<i32>} : memref<8x128xf32, #tpu.memory_space<vmem>>, vector<8x128xf32>,
    return
  }
  func.func @transform_0(%arg0: i32, %arg1: i32) -> (i32, i32) {
    %c0_i32 = arith.constant 0 : i32
    %c0_i32_0 = arith.constant 0 : i32
    return %arg1, %c0_i32 : i32, i32
  }
  func.func @transform_1(%arg0: i32, %arg1: i32) -> (i32, i32) {
    %c0_i32 = arith.constant 0 : i32
    %c0_i32_0 = arith.constant 0 : i32
    return %arg0, %c0_i32 : i32, i32
  }
  func.func @transform_2(%arg0: i32, %arg1: i32) -> (i32, i32) {
    %c0_i32 = arith.constant 0 : i32
    %c0_i32_0 = arith.constant 0 : i32
    return %c0_i32, %arg0 : i32, i32
  }
  func.func @transform_3(%arg0: i32, %arg1: i32) -> (i32, i32) {
    %c0_i32 = arith.constant 0 : i32
    return %arg1, %arg0 : i32, i32
  }
}

</mosaic_0001>

<llo_original>
// kernel: _lambda_.1
$region0: #{_lambda_.1}
  #allocation0 [shape = 'u32[]', space=smem, size = 0x4, offset = 0x4, fixed_abs, tag = 'smem constant byte address 0x4 - core index']
  #allocation1 [shape = 'u32[144,128]{1,0:T(1,128)}', space=vmem, size = 0x12000, scoped, tag = 'internal scratch']
  %s0 = inlined_call_operand.vmem [shape: f32[8,128], index: 0, kind: input, shape index: {}]
  %s1 = inlined_call_operand.hbm [shape: f32[128,128], index: 1, kind: input, shape index: {}]
  %s2 = inlined_call_operand.vmem [shape: f32[1,128], index: 2, kind: input, shape index: {}]
  %s3 = inlined_call_operand.hbm [shape: f32[8,128], index: 3, kind: output, shape index: {}]
  %s4 = sld [smem:[#allocation0]]
  $region26: #{_lambda_.1} parent=0
    _
  %s6 = ssub.s32 1, %s4
  %s7 = scalar_select 0, %s6, %s4
  $region1: #{_lambda_.1} parent=0
    #allocation2 [shape = 'u8[65536]{0}', space=vmem, size = 0x10000, scoped, tag = 'input window, operand 1, single buffered']
    #allocation3 [shape = 's32[1]{0}', space=sflag, size = 0x4, scoped, tag = 'scoped memory for _lambda_.1']
    #allocation4 [shape = 's32[1]{0}', space=sflag, size = 0x4, scoped, tag = 'scoped memory for _lambda_.1']
    #allocation5 [shape = 'u8[4096]{0}', space=vmem, size = 0x1000, scoped, tag = 'output window, operand 0, single buffered']
    %8 = vsyncpa [#allocation3], 0
    %9 = vsyncpa [#allocation4], 0
    // Predicated region
    $region2: #{_lambda_.1} parent=1 // pred_check
      _
    $region3: #{_lambda_.1} parent=1 // pred_check_branch
      %11 = sbr.rel (0) target = $region5
    $region4: #{_lambda_.1} parent=1 // pred_region
      _
    $region5: #{_lambda_.1} parent=1 // pred_fallthru
      _
    // Predicated region
    $region6: #{_lambda_.1} parent=1 // pred_check
      _
    $region7: #{_lambda_.1} parent=1 // pred_check_branch
      %13 = sbr.rel (0) target = $region9
    $region8: #{_lambda_.1} parent=1 // pred_region
      %s15 = ssub.s32 2048, 2048
      %16 = vsyncadd [#allocation3], %s15
      %s17 = sshll.u32 [#allocation2], 4
      %s18 = int_to_ptr.vmem [resolvable:$true] %s17
      %23 = dma.hbm_to_vmem [thread:$0]  %s1, 2048, %s18, [#allocation3], 128, 128, 8
    $region9: #{_lambda_.1} parent=1 // pred_fallthru
      _
    // Predicated region
    $region10: #{_lambda_.1} parent=1 // pred_check
      _
    $region11: #{_lambda_.1} parent=1 // pred_check_branch
      %25 = sbr.rel (0) target = $region13
    $region12: #{_lambda_.1} parent=1 // pred_region
      _
    $region13: #{_lambda_.1} parent=1 // pred_fallthru
      _
    // Predicated region
    $region14: #{_lambda_.1} parent=1 // pred_check
      _
    $region15: #{_lambda_.1} parent=1 // pred_check_branch
      %27 = sbr.rel (0) target = $region17
    $region16: #{_lambda_.1} parent=1 // pred_region
      %28 = dma.done [#allocation3], 2048
    $region17: #{_lambda_.1} parent=1 // pred_fallthru
      _
    %v29 = vld [vmem:[%s0] sm:$0xff]
    %v30 = vld [vmem:[#allocation2] sm:$0xff]
    %v31 = vld [vmem:[#allocation2 + $0x8] sm:$0xff]
    %v32 = vld [vmem:[#allocation2 + $0x10] sm:$0xff]
    %v33 = vld [vmem:[#allocation2 + $0x18] sm:$0xff]
    %v34 = vld [vmem:[#allocation2 + $0x20] sm:$0xff]
    %v35 = vld [vmem:[#allocation2 + $0x28] sm:$0xff]
    %v36 = vld [vmem:[#allocation2 + $0x30] sm:$0xff]
    %v37 = vld [vmem:[#allocation2 + $0x38] sm:$0xff]
    %v38 = vld [vmem:[#allocation2 + $0x40] sm:$0xff]
    %v39 = vld [vmem:[#allocation2 + $0x48] sm:$0xff]
    %v40 = vld [vmem:[#allocation2 + $0x50] sm:$0xff]
    %v41 = vld [vmem:[#allocation2 + $0x58] sm:$0xff]
    %v42 = vld [vmem:[#allocation2 + $0x60] sm:$0xff]
    %v43 = vld [vmem:[#allocation2 + $0x68] sm:$0xff]
    %v44 = vld [vmem:[#allocation2 + $0x70] sm:$0xff]
    %v45 = vld [vmem:[#allocation2 + $0x78] sm:$0xff]
    %v46 = vld [vmem:[%s2] sm:$0x1]
    %v48 = vlaneseq
    %v49 = vshrl.u32 %v48, 7
    %v50 = vsub.s32 0, %v49
    %v51 = vrot.slane %v46, %v50
    %53 = vmatprep.subr.mxu0 0.0
    %54 = vmatpush1.xpose.msra.mxu0 %v45
    %55 = vmatprep.subr.mxu0 0.0
    %56 = vmatpush1.xpose.msra.mxu0 %v44
    %57 = vmatprep.subr.mxu0 0.0
    %58 = vmatpush1.xpose.msra.mxu0 %v43
    %59 = vmatprep.subr.mxu0 0.0
    %60 = vmatpush1.xpose.msra.mxu0 %v42
    %61 = vmatprep.subr.mxu0 0.0
    %62 = vmatpush1.xpose.msra.mxu0 %v41
    %63 = vmatprep.subr.mxu0 0.0
    %64 = vmatpush1.xpose.msra.mxu0 %v40
    %65 = vmatprep.subr.mxu0 0.0
    %66 = vmatpush1.xpose.msra.mxu0 %v39
    %67 = vmatprep.subr.mxu0 0.0
    %68 = vmatpush1.xpose.msra.mxu0 %v38
    %69 = vmatprep.subr.mxu0 0.0
    %70 = vmatpush1.xpose.msra.mxu0 %v37
    %71 = vmatprep.subr.mxu0 0.0
    %72 = vmatpush1.xpose.msra.mxu0 %v36
    %73 = vmatprep.subr.mxu0 0.0
    %74 = vmatpush1.xpose.msra.mxu0 %v35
    %75 = vmatprep.subr.mxu0 0.0
    %76 = vmatpush1.xpose.msra.mxu0 %v34
    %77 = vmatprep.subr.mxu0 0.0
    %78 = vmatpush1.xpose.msra.mxu0 %v33
    %79 = vmatprep.subr.mxu0 0.0
    %80 = vmatpush1.xpose.msra.mxu0 %v32
    %81 = vmatprep.subr.mxu0 0.0
    %82 = vmatpush1.xpose.msra.mxu0 %v31
    %83 = vmatprep.subr.mxu0 0.0
    %84 = vmatpush1.xpose.msra.mxu0 %v30
    %85 = vmatprep.subr.mxu0 0.0
    %86 = vmatpush2.xpose.msra.mxu0 0.0
    %87 = vmatprep.subr.mxu0 0.0
    %88 = vmatpush2.xpose.msra.mxu0 0.0
    %89 = vmatprep.subr.mxu0 0.0
    %90 = vmatpush2.xpose.msra.mxu0 0.0
    %91 = vmatprep.subr.mxu0 0.0
    %92 = vmatpush2.xpose.msra.mxu0 0.0
    %93 = vmatprep.subr.mxu0 0.0
    %94 = vmatpush2.xpose.msra.mxu0 0.0
    %95 = vmatprep.subr.mxu0 0.0
    %96 = vmatpush2.xpose.msra.mxu0 0.0
    %97 = vmatprep.subr.mxu0 0.0
    %98 = vmatpush2.xpose.msra.mxu0 0.0
    %99 = vmatprep.subr.mxu0 0.0
    %100 = vmatpush2.xpose.msra.mxu0 0.0
    %101 = vmatprep.subr.mxu0 0.0
    %102 = vmatpush2.xpose.msra.mxu0 0.0
    %103 = vmatprep.subr.mxu0 0.0
    %104 = vmatpush2.xpose.msra.mxu0 0.0
    %105 = vmatprep.subr.mxu0 0.0
    %106 = vmatpush2.xpose.msra.mxu0 0.0
    %107 = vmatprep.subr.mxu0 0.0
    %108 = vmatpush2.xpose.msra.mxu0 0.0
    %109 = vmatprep.subr.mxu0 0.0
    %110 = vmatpush2.xpose.msra.mxu0 0.0
    %111 = vmatprep.subr.mxu0 0.0
    %112 = vmatpush2.xpose.msra.mxu0 0.0
    %113 = vmatprep.subr.mxu0 0.0
    %114 = vmatpush2.xpose.msra.mxu0 0.0
    %115 = vmatprep.subr.mxu0 0.0
    %116 = vmatpush2.xpose.msra.mxu0 0.0
    %117 = vmatprep.mubr.f32.mxu0 0.0
    %118 = vmatmul.mubr.f32.gmra.mxu0 %v29
    %v119 = vpop.f32.mrf.mxu0
    %v120 = vadd.f32 %v51, %v119
    %v121 = vpop.f32.mrf.mxu0
    %122 = vdwg.mxu0
    %123 = vst [vmem:[#allocation5] sm:$0xff] %v120
    // Predicated region
    $region18: #{_lambda_.1} parent=1 // pred_check
      _
    $region19: #{_lambda_.1} parent=1 // pred_check_branch
      %125 = sbr.rel (0) target = $region21
    $region20: #{_lambda_.1} parent=1 // pred_region
      %s127 = ssub.s32 128, 128
      %128 = vsyncadd [#allocation4], %s127
      %s130 = sshll.u32 [#allocation5], 4
      %s131 = int_to_ptr.vmem [resolvable:$true] %s130
      %133 = dma.vmem_to_hbm [thread:$0]  %s131, 128, %s3, [#allocation4]
    $region21: #{_lambda_.1} parent=1 // pred_fallthru
      _
    // Predicated region
    $region22: #{_lambda_.1} parent=1 // pred_check
      _
    $region23: #{_lambda_.1} parent=1 // pred_check_branch
      %135 = sbr.rel (0) target = $region25
    $region24: #{_lambda_.1} parent=1 // pred_region
      %136 = dma.done [#allocation4], 128
    $region25: #{_lambda_.1} parent=1 // pred_fallthru
      _
    %137 = vsyncpa [#allocation3], 1
    %138 = vsyncpa [#allocation4], 1

</llo_original>
